<compile_context>
chip_gen: v6e
topology: v6e:2x2x1
jax: 0.10.0
libtpu: 0.0.40
codegen_flags: <defaults>
</compile_context>

<pallas_src>
import math

import jax
import jax.numpy as jnp
from jax.experimental import pallas as pl
from jax.experimental.pallas import tpu as pltpu


def _round_up(n, m):
    return ((n + m - 1) // m) * m


def _pos_enc_kernel(idx_ref, x_ref, pe_ref, o_ref, acc_ref):
    """One (rows_tile x D_pad) output tile; contraction over max_len chunks.

    idx_ref: (R, 1)   int32  flattened depth indices for this row tile
    x_ref  : (R, Dp)  f32    input rows (block index constant over k -> DMA'd once)
    pe_ref : (Lt, Dp) f32    current max_len chunk of the sinusoid table
    o_ref  : (R, Dp)         output rows
    acc_ref: (R, Dp)  f32    VMEM accumulator (x + gathered pe)
    """
    k = pl.program_id(1)
    rows = idx_ref.shape[0]
    len_tile = pe_ref.shape[0]

    @pl.when(k == 0)
    def _init():
        acc_ref[...] = x_ref[...].astype(jnp.float32)

    # one-hot (rows, len_tile): onehot[r, m] = (idx[r] == k * len_tile + m)
    col = jax.lax.broadcasted_iota(jnp.int32, (rows, len_tile), 1) + k * len_tile
    onehot = (col == idx_ref[...]).astype(pe_ref.dtype)          # lane-dense LHS

    # (R, Dp) += (R, Lt) @ (Lt, Dp) on the MXU
    acc_ref[...] += jax.lax.dot_general(
        onehot, pe_ref[...],
        dimension_numbers=(((1,), (0,)), ((), ())),
        preferred_element_type=jnp.float32,
    )

    @pl.when(k == pl.num_programs(1) - 1)
    def _finalize():
        o_ref[...] = acc_ref[...].astype(o_ref.dtype)


class PositionalEncoding:
    """JAX/Pallas port of the PyTorch sinusoidal PositionalEncoding module."""

    # pe table (incl. its double buffer) kept fully VMEM-resident up to this
    # many bytes; beyond that the contraction axis is tiled (v7x: 64 MiB VMEM,
    # 32 MiB scoped default).
    _PE_VMEM_BUDGET = 16 * 1024 * 1024
    # Explicit scoped-VMEM limit: safe on v5e/v6e/v7x, above v5e's 16 MiB default.
    _VMEM_LIMIT = 32 * 1024 * 1024

    def __init__(self, d_model, max_len=1000, block_rows=256, block_len=512):
        assert d_model % 2 == 0, "d_model must be even (matches torch module usage)"
        self.d_model = d_model
        self.max_len = max_len
        # 256 matches the 2x256x256 MXU on v6e/v7x; use block_rows=128 on v5e (4x128x128 MXU).
        self.block_rows = block_rows
        self.block_len = block_len

        position = jnp.arange(max_len, dtype=jnp.float32)[:, None]          # (max_len, 1)
        div_term = jnp.exp(
            jnp.arange(0, d_model, 2, dtype=jnp.float32) * (-math.log(10000.0) / d_model)
        )                                                                    # (d_model//2,)
        angles = position * div_term                                         # (max_len, d_model//2)
        pe = jnp.zeros((max_len, d_model), dtype=jnp.float32)
        pe = pe.at[:, 0::2].set(jnp.sin(angles))
        pe = pe.at[:, 1::2].set(jnp.cos(angles))
        self.pe = pe                                                         # (max_len, d_model) f32

    def __call__(self, x, depth_indices):
        B, S, D = x.shape
        n_rows = B * S

        # ---- lane/sublane-aligned padded sizes ---------------------------------
        d_pad = _round_up(D, 128)                          # lane-dense output (no vst.msk)
        rows_tile = min(self.block_rows, _round_up(n_rows, 8))
        rows_pad = _round_up(n_rows, rows_tile)

        len_full = _round_up(self.max_len, 128)
        if 2 * len_full * d_pad * 4 <= self._PE_VMEM_BUDGET:
            len_tile = len_full                            # whole table resident, fetched once
        else:
            len_tile = min(self.block_len, len_full)       # stream the table in chunks
        len_pad = _round_up(len_full, len_tile)

        # ---- pad operands (padded indices = 0 -> in range; padded rows sliced off) ----
        x_flat = jnp.pad(x.reshape(n_rows, D),
                         ((0, rows_pad - n_rows), (0, d_pad - D)))
        idx = jnp.pad(depth_indices.astype(jnp.int32).reshape(n_rows, 1),
                      ((0, rows_pad - n_rows), (0, 0)))
        pe = jnp.pad(self.pe, ((0, len_pad - self.max_len), (0, d_pad - D)))

        grid = (rows_pad // rows_tile, len_pad // len_tile)

        out = pl.pallas_call(
            _pos_enc_kernel,
            out_shape=jax.ShapeDtypeStruct((rows_pad, d_pad), x.dtype),
            grid=grid,
            in_specs=[
                pl.BlockSpec((rows_tile, 1), lambda i, k: (i, 0)),
                pl.BlockSpec((rows_tile, d_pad), lambda i, k: (i, 0)),
                pl.BlockSpec((len_tile, d_pad), lambda i, k: (k, 0)),
            ],
            out_specs=pl.BlockSpec((rows_tile, d_pad), lambda i, k: (i, 0)),
            scratch_shapes=[pltpu.VMEM((rows_tile, d_pad), jnp.float32)],
            compiler_params=pltpu.CompilerParams(
                dimension_semantics=("parallel", "arbitrary"),
                vmem_limit_bytes=self._VMEM_LIMIT,
            ),
        )(idx, x_flat, pe)

        out = out[:n_rows, :D].reshape(B, S, D)
        # PyTorch broadcasting: x [B,S,D] + pe[:, idx, :] [1,B,S,D] -> [1,B,S,D]
        return out[None, ...]


if __name__ == "__main__":
    B, S, D = 2, 8, 32
    MAX_LEN = 128

    key = jax.random.PRNGKey(0)
    kx, kidx = jax.random.split(key)
    x = jax.random.normal(kx, (B, S, D), dtype=jnp.float32)
    depth_indices = jax.random.randint(kidx, (B, S), 0, MAX_LEN, dtype=jnp.int32)

    module = PositionalEncoding(d_model=D, max_len=MAX_LEN)
    out = jax.block_until_ready(module(x, depth_indices))

    # reference (plain JAX, mirrors the PyTorch forward exactly)
    ref = x + module.pe[None][:, depth_indices, :]
    assert out.shape == (1, B, S, D), out.shape
    assert jnp.allclose(out, ref, atol=1e-5, rtol=1e-5), "mismatch vs reference"

    print("KERNEL_OK")
</pallas_src>

<mosaic_0001>
module attributes {stable_mosaic.version = 11 : i64} {
  func.func @_pos_enc_kernel(%arg0: i32, %arg1: i32, %arg2: memref<16x1xi32, #tpu.memory_space<vmem>>, %arg3: memref<16x128xf32, #tpu.memory_space<vmem>>, %arg4: memref<128x128xf32, #tpu.memory_space<vmem>>, %arg5: memref<16x128xf32, #tpu.memory_space<vmem>>, %arg6: memref<16x128xf32, #tpu.memory_space<vmem>>) attributes {dimension_semantics = [#tpu.dimension_semantics<parallel>, #tpu.dimension_semantics<arbitrary>], iteration_bounds = array<i64: 1, 1>, scalar_prefetch = 0 : i64, scratch_operands = 1 : i64, tpu.core_type = #tpu.core_type<tc>, window_params = [{transform_indices = @transform_0, window_bounds = array<i64: 16, 1>}, {transform_indices = @transform_1, window_bounds = array<i64: 16, 128>}, {transform_indices = @transform_2, window_bounds = array<i64: 128, 128>}, {transform_indices = @transform_3, window_bounds = array<i64: 16, 128>}]} {
    %c0_i32 = arith.constant 0 : i32
    %0 = arith.cmpi eq, %arg1, %c0_i32 : i32
    %1 = arith.extui %0 : i1 to i32
    %c0_i32_0 = arith.constant 0 : i32
    %2 = arith.cmpi ne, %1, %c0_i32_0 : i32
    scf.if %2 {
      %c0_10 = arith.constant 0 : index
      %c0_11 = arith.constant 0 : index
      %20 = vector.load %arg3[%c0_10, %c0_11] : memref<16x128xf32, #tpu.memory_space<vmem>>, vector<16x128xf32>
      %c0_12 = arith.constant 0 : index
      %c0_13 = arith.constant 0 : index
      %21 = vector.load %arg6[%c0_12, %c0_13] : memref<16x128xf32, #tpu.memory_space<vmem>>, vector<16x128xf32>
      tpu.vector_store %arg6[%c0_12, %c0_13], %20 {strides = array<i32>} : memref<16x128xf32, #tpu.memory_space<vmem>>, vector<16x128xf32>,
    } else {
    }
    %3 = tpu.iota {dimensions = array<i32: 1>} : vector<16x128xi32>
    %c128_i32 = arith.constant 128 : i32
    %4 = arith.muli %arg1, %c128_i32 : i32
    %5 = vector.broadcast %4 : i32 to vector<16x128xi32>
    %6 = arith.addi %3, %5 : vector<16x128xi32>
    %c0 = arith.constant 0 : index
    %c0_1 = arith.constant 0 : index
    %7 = vector.load %arg2[%c0, %c0_1] : memref<16x1xi32, #tpu.memory_space<vmem>>, vector<16x1xi32>
    %8 = vector.broadcast %7 : vector<16x1xi32> to vector<16x128xi32>
    %9 = arith.cmpi eq, %6, %8 : vector<16x128xi32>
    %10 = arith.extui %9 : vector<16x128xi1> to vector<16x128xi32>
    %11 = arith.sitofp %10 : vector<16x128xi32> to vector<16x128xf32>
    %c0_2 = arith.constant 0 : index
    %c0_3 = arith.constant 0 : index
    %12 = vector.load %arg6[%c0_2, %c0_3] : memref<16x128xf32, #tpu.memory_space<vmem>>, vector<16x128xf32>
    %c0_4 = arith.constant 0 : index
    %c0_5 = arith.constant 0 : index
    %13 = vector.load %arg4[%c0_4, %c0_5] : memref<128x128xf32, #tpu.memory_space<vmem>>, vector<128x128xf32>
    %cst = arith.constant dense<0.000000e+00> : vector<16x128xf32>
    %14 = tpu.matmul %11, %13, %cst {dimension_numbers = #tpu.dot_dimension_numbers<[1], [0], [0], [1], [0, 0, 1, 1], [], []>} : vector<16x128xf32>, vector<128x128xf32>, vector<16x128xf32> -> vector<16x128xf32>
    %15 = arith.addf %12, %14 : vector<16x128xf32>
    %c0_6 = arith.constant 0 : index
    %c0_7 = arith.constant 0 : index
    %16 = vector.load %arg6[%c0_6, %c0_7] : memref<16x128xf32, #tpu.memory_space<vmem>>, vector<16x128xf32>
    tpu.vector_store %arg6[%c0_6, %c0_7], %15 {strides = array<i32>} : memref<16x128xf32, #tpu.memory_space<vmem>>, vector<16x128xf32>,
    %c0_i32_8 = arith.constant 0 : i32
    %17 = arith.cmpi eq, %arg1, %c0_i32_8 : i32
    %18 = arith.extui %17 : i1 to i32
    %c0_i32_9 = arith.constant 0 : i32
    %19 = arith.cmpi ne, %18, %c0_i32_9 : i32
    scf.if %19 {
      %c0_10 = arith.constant 0 : index
      %c0_11 = arith.constant 0 : index
      %20 = vector.load %arg6[%c0_10, %c0_11] : memref<16x128xf32, #tpu.memory_space<vmem>>, vector<16x128xf32>
      %c0_12 = arith.constant 0 : index
      %c0_13 = arith.constant 0 : index
      %21 = vector.load %arg5[%c0_12, %c0_13] : memref<16x128xf32, #tpu.memory_space<vmem>>, vector<16x128xf32>
      tpu.vector_store %arg5[%c0_12, %c0_13], %20 {strides = array<i32>} : memref<16x128xf32, #tpu.memory_space<vmem>>, vector<16x128xf32>,
    } else {
    }
    return
  }
  func.func @transform_0(%arg0: i32, %arg1: i32) -> (i32, i32) {
    %c0_i32 = arith.constant 0 : i32
    %c0_i32_0 = arith.constant 0 : i32
    return %arg0, %c0_i32 : i32, i32
  }
  func.func @transform_1(%arg0: i32, %arg1: i32) -> (i32, i32) {
    %c0_i32 = arith.constant 0 : i32
    %c0_i32_0 = arith.constant 0 : i32
    return %arg0, %c0_i32 : i32, i32
  }
  func.func @transform_2(%arg0: i32, %arg1: i32) -> (i32, i32) {
    %c0_i32 = arith.constant 0 : i32
    %c0_i32_0 = arith.constant 0 : i32
    return %arg1, %c0_i32 : i32, i32
  }
  func.func @transform_3(%arg0: i32, %arg1: i32) -> (i32, i32) {
    %c0_i32 = arith.constant 0 : i32
    %c0_i32_0 = arith.constant 0 : i32
    return %arg0, %c0_i32 : i32, i32
  }
}

</mosaic_0001>

<llo_original>
// kernel: tpu_custom_call.1
$region0: #{tpu_custom_call.1}
  #allocation0 [shape = 'u32[]', space=smem, size = 0x4, offset = 0x4, fixed_abs, tag = 'smem constant byte address 0x4 - core index']
  #allocation1 [shape = 'u32[144,128]{1,0:T(1,128)}', space=vmem, size = 0x12000, scoped, tag = 'internal scratch']
  #allocation2 [shape = 'f32[16,128]{1,0:T(8,128)}', space=vmem, size = 0x2000, scoped, tag = 'scratch operand']
  %s0 = inlined_call_operand.vmem [shape: s32[16,1], index: 0, kind: input, shape index: {}]
  %s1 = inlined_call_operand.vmem [shape: f32[16,128], index: 1, kind: input, shape index: {}]
  %s2 = inlined_call_operand.hbm [shape: f32[128,128], index: 2, kind: input, shape index: {}]
  %s3 = inlined_call_operand.hbm [shape: f32[16,128], index: 3, kind: output, shape index: {}]
  %s4 = sld [smem:[#allocation0]]
  $region34: #{tpu_custom_call.1} parent=0
    _
  %s6 = ssub.s32 1, %s4
  %s7 = scalar_select 0, %s6, %s4
  $region1: #{tpu_custom_call.1} parent=0
    #allocation3 [shape = 'u8[65536]{0}', space=vmem, size = 0x10000, scoped, tag = 'input window, operand 2, single buffered']
    #allocation4 [shape = 's32[1]{0}', space=sflag, size = 0x4, scoped, tag = 'scoped memory for tpu_custom_call.1']
    #allocation5 [shape = 's32[1]{0}', space=sflag, size = 0x4, scoped, tag = 'scoped memory for tpu_custom_call.1']
    #allocation6 [shape = 'u8[8192]{0}', space=vmem, size = 0x2000, scoped, tag = 'output window, operand 0, single buffered']
    %8 = vsyncpa [#allocation4], 0
    %9 = vsyncpa [#allocation5], 0
    // Predicated region
    $region2: #{tpu_custom_call.1} parent=1 // pred_check
      _
    $region3: #{tpu_custom_call.1} parent=1 // pred_check_branch
      %11 = sbr.rel (0) target = $region5
    $region4: #{tpu_custom_call.1} parent=1 // pred_region
      _
    $region5: #{tpu_custom_call.1} parent=1 // pred_fallthru
      _
    // Predicated region
    $region6: #{tpu_custom_call.1} parent=1 // pred_check
      _
    $region7: #{tpu_custom_call.1} parent=1 // pred_check_branch
      %13 = sbr.rel (0) target = $region9
    $region8: #{tpu_custom_call.1} parent=1 // pred_region
      _
    $region9: #{tpu_custom_call.1} parent=1 // pred_fallthru
      _
    // Predicated region
    $region10: #{tpu_custom_call.1} parent=1 // pred_check
      _
    $region11: #{tpu_custom_call.1} parent=1 // pred_check_branch
      %15 = sbr.rel (0) target = $region13
    $region12: #{tpu_custom_call.1} parent=1 // pred_region
      %s17 = ssub.s32 2048, 2048
      %18 = vsyncadd [#allocation4], %s17
      %s19 = sshll.u32 [#allocation3], 4
      %s20 = int_to_ptr.vmem [resolvable:$true] %s19
      %25 = dma.hbm_to_vmem [thread:$0]  %s2, 2048, %s20, [#allocation4], 128, 128, 8
    $region13: #{tpu_custom_call.1} parent=1 // pred_fallthru
      _
    // Predicated region
    $region14: #{tpu_custom_call.1} parent=1 // pred_check
      _
    $region15: #{tpu_custom_call.1} parent=1 // pred_check_branch
      %27 = sbr.rel (0) target = $region17
    $region16: #{tpu_custom_call.1} parent=1 // pred_region
      %28 = dma.done [#allocation4], 2048
    $region17: #{tpu_custom_call.1} parent=1 // pred_fallthru
      _
    %p29 = scmp.eq.s32.totalorder 0, 0
    // Predicated region
    $region18: #{tpu_custom_call.1} parent=1 // pred_check
      %p30 = pneg %p29
    $region19: #{tpu_custom_call.1} parent=1 // pred_check_branch
      %32 = sbr.rel (%p30) target = $region21
    $region20: #{tpu_custom_call.1} parent=1 // pred_region
      %v33 = vld [vmem:[%s1] sm:$0xff]
      %v34 = vld [vmem:[%s1 + $0x8] sm:$0xff]
      %35 = vst [vmem:[#allocation2] sm:$0xff] %v33
      %36 = vst [vmem:[#allocation2 + $0x8] sm:$0xff] %v34
    $region21: #{tpu_custom_call.1} parent=1 // pred_fallthru
      _
    %v37 = vlaneseq
    %v38 = vand.u32 %v37, 127
    %s39 = smul.u32 0, 128
    %v40 = vstv %s39
    %v41 = vadd.s32 %v38, %v40
    %v42 = vld [vmem:[%s0] sm:$0xff]
    %v43 = vld [vmem:[%s0 + $0x8] sm:$0xff]
    %44 = vset.pattern.permute.xlu0 0
    %45 = vperm.xlu0 %44, %v42
    %v46 = vpop.permute.xlu0 %45
    %47 = vset.pattern.permute.xlu0 0
    %48 = vperm.xlu0 %47, %v43
    %v49 = vpop.permute.xlu0 %48
    %vm50 = vcmp.eq.s32.totalorder %v41, %v46
    %vm51 = vcmp.eq.s32.totalorder %v41, %v49
    %v52 = vsel %vm50, 1, 0
    %v53 = vsel %vm51, 1, 0
    %v54 = vcvt.s32.f32 %v52
    %v55 = vcvt.s32.f32 %v53
    %v56 = vld [vmem:[#allocation2] sm:$0xff]
    %v57 = vld [vmem:[#allocation2 + $0x8] sm:$0xff]
    %v58 = vld [vmem:[#allocation3] sm:$0xff]
    %v59 = vld [vmem:[#allocation3 + $0x8] sm:$0xff]
    %v60 = vld [vmem:[#allocation3 + $0x10] sm:$0xff]
    %v61 = vld [vmem:[#allocation3 + $0x18] sm:$0xff]
    %v62 = vld [vmem:[#allocation3 + $0x20] sm:$0xff]
    %v63 = vld [vmem:[#allocation3 + $0x28] sm:$0xff]
    %v64 = vld [vmem:[#allocation3 + $0x30] sm:$0xff]
    %v65 = vld [vmem:[#allocation3 + $0x38] sm:$0xff]
    %v66 = vld [vmem:[#allocation3 + $0x40] sm:$0xff]
    %v67 = vld [vmem:[#allocation3 + $0x48] sm:$0xff]
    %v68 = vld [vmem:[#allocation3 + $0x50] sm:$0xff]
    %v69 = vld [vmem:[#allocation3 + $0x58] sm:$0xff]
    %v70 = vld [vmem:[#allocation3 + $0x60] sm:$0xff]
    %v71 = vld [vmem:[#allocation3 + $0x68] sm:$0xff]
    %v72 = vld [vmem:[#allocation3 + $0x70] sm:$0xff]
    %v73 = vld [vmem:[#allocation3 + $0x78] sm:$0xff]
    %74 = vmatprep.subr.mxu0 0.0
    %75 = vmatpush1.msra.mxu0 %v73
    %76 = vmatprep.subr.mxu0 0.0
    %77 = vmatpush1.msra.mxu0 %v72
    %78 = vmatprep.subr.mxu0 0.0
    %79 = vmatpush1.msra.mxu0 %v71
    %80 = vmatprep.subr.mxu0 0.0
    %81 = vmatpush1.msra.mxu0 %v70
    %82 = vmatprep.subr.mxu0 0.0
    %83 = vmatpush1.msra.mxu0 %v69
    %84 = vmatprep.subr.mxu0 0.0
    %85 = vmatpush1.msra.mxu0 %v68
    %86 = vmatprep.subr.mxu0 0.0
    %87 = vmatpush1.msra.mxu0 %v67
    %88 = vmatprep.subr.mxu0 0.0
    %89 = vmatpush1.msra.mxu0 %v66
    %90 = vmatprep.subr.mxu0 0.0
    %91 = vmatpush1.msra.mxu0 %v65
    %92 = vmatprep.subr.mxu0 0.0
    %93 = vmatpush1.msra.mxu0 %v64
    %94 = vmatprep.subr.mxu0 0.0
    %95 = vmatpush1.msra.mxu0 %v63
    %96 = vmatprep.subr.mxu0 0.0
    %97 = vmatpush1.msra.mxu0 %v62
    %98 = vmatprep.subr.mxu0 0.0
    %99 = vmatpush1.msra.mxu0 %v61
    %100 = vmatprep.subr.mxu0 0.0
    %101 = vmatpush1.msra.mxu0 %v60
    %102 = vmatprep.subr.mxu0 0.0
    %103 = vmatpush1.msra.mxu0 %v59
    %104 = vmatprep.subr.mxu0 0.0
    %105 = vmatpush1.msra.mxu0 %v58
    %106 = vmatprep.subr.mxu0 0.0
    %107 = vmatpush2.msra.mxu0 0.0
    %108 = vmatprep.subr.mxu0 0.0
    %109 = vmatpush2.msra.mxu0 0.0
    %110 = vmatprep.subr.mxu0 0.0
    %111 = vmatpush2.msra.mxu0 0.0
    %112 = vmatprep.subr.mxu0 0.0
    %113 = vmatpush2.msra.mxu0 0.0
    %114 = vmatprep.subr.mxu0 0.0
    %115 = vmatpush2.msra.mxu0 0.0
    %116 = vmatprep.subr.mxu0 0.0
    %117 = vmatpush2.msra.mxu0 0.0
    %118 = vmatprep.subr.mxu0 0.0
    %119 = vmatpush2.msra.mxu0 0.0
    %120 = vmatprep.subr.mxu0 0.0
    %121 = vmatpush2.msra.mxu0 0.0
    %122 = vmatprep.subr.mxu0 0.0
    %123 = vmatpush2.msra.mxu0 0.0
    %124 = vmatprep.subr.mxu0 0.0
    %125 = vmatpush2.msra.mxu0 0.0
    %126 = vmatprep.subr.mxu0 0.0
    %127 = vmatpush2.msra.mxu0 0.0
    %128 = vmatprep.subr.mxu0 0.0
    %129 = vmatpush2.msra.mxu0 0.0
    %130 = vmatprep.subr.mxu0 0.0
    %131 = vmatpush2.msra.mxu0 0.0
    %132 = vmatprep.subr.mxu0 0.0
    %133 = vmatpush2.msra.mxu0 0.0
    %134 = vmatprep.subr.mxu0 0.0
    %135 = vmatpush2.msra.mxu0 0.0
    %136 = vmatprep.subr.mxu0 0.0
    %137 = vmatpush2.msra.mxu0 0.0
    %138 = vmatprep.mubr.f32.mxu0 0.0
    %139 = vmatmul.mubr.f32.gmra.mxu0 %v54
    %v140 = vpop.f32.mrf.mxu0
    %v141 = vadd.f32 0.0, %v140
    %v142 = vpop.f32.mrf.mxu0
    %143 = vmatprep.mubr.f32.mxu0 0.0
    %144 = vmatmul.mubr.f32.gmra.mxu0 %v55
    %v145 = vpop.f32.mrf.mxu0
    %v146 = vadd.f32 0.0, %v145
    %v147 = vpop.f32.mrf.mxu0
    %148 = vdwg.mxu0
    %v149 = vadd.f32 %v56, %v141
    %v150 = vadd.f32 %v57, %v146
    %151 = vst [vmem:[#allocation2] sm:$0xff] %v149
    %152 = vst [vmem:[#allocation2 + $0x8] sm:$0xff] %v150
    // Predicated region
    $region22: #{tpu_custom_call.1} parent=1 // pred_check
      %p153 = pneg %p29
    $region23: #{tpu_custom_call.1} parent=1 // pred_check_branch
      %155 = sbr.rel (%p153) target = $region25
    $region24: #{tpu_custom_call.1} parent=1 // pred_region
      %v156 = vld [vmem:[#allocation2] sm:$0xff]
      %v157 = vld [vmem:[#allocation2 + $0x8] sm:$0xff]
      %158 = vst [vmem:[#allocation6] sm:$0xff] %v156
      %159 = vst [vmem:[#allocation6 + $0x8] sm:$0xff] %v157
    $region25: #{tpu_custom_call.1} parent=1 // pred_fallthru
      _
    // Predicated region
    $region26: #{tpu_custom_call.1} parent=1 // pred_check
      _
    $region27: #{tpu_custom_call.1} parent=1 // pred_check_branch
      %161 = sbr.rel (0) target = $region29
    $region28: #{tpu_custom_call.1} parent=1 // pred_region
      %s163 = ssub.s32 256, 256
      %164 = vsyncadd [#allocation5], %s163
      %s165 = sshll.u32 [#allocation6], 4
      %s166 = int_to_ptr.vmem [resolvable:$true] %s165
      %171 = dma.vmem_to_hbm [thread:$0]  %s166, 256, %s3, [#allocation5], 128, 128, 8
    $region29: #{tpu_custom_call.1} parent=1 // pred_fallthru
      _
    // Predicated region
    $region30: #{tpu_custom_call.1} parent=1 // pred_check
      _
    $region31: #{tpu_custom_call.1} parent=1 // pred_check_branch
      %173 = sbr.rel (0) target = $region33
    $region32: #{tpu_custom_call.1} parent=1 // pred_region
      %174 = dma.done [#allocation5], 256
    $region33: #{tpu_custom_call.1} parent=1 // pred_fallthru
      _
    %175 = vsyncpa [#allocation4], 1
    %176 = vsyncpa [#allocation5], 1

</llo_original>
